<compile_context>
chip_gen: v7x
topology: tpu7x:2x2x1
jax: 0.10.0
libtpu: 0.0.40
codegen_flags: <defaults>
</compile_context>

<pallas_src>
import functools

import jax
import jax.numpy as jnp
from jax import lax
from jax.experimental import pallas as pl
from jax.experimental.pallas import tpu as pltpu  # noqa: F401  (TPU backend)

EMBEDDING_DIM = 16
NUM_HEADS = 4
MODEL_DIM = EMBEDDING_DIM * 4          # 64
HEAD_DIM = MODEL_DIM // NUM_HEADS      # 16
FC1_DIM = 16

# Column layout of the folded projection slab (lane axis, padded to 256):
#   [  0 ..  63]  Q columns of in-proj (attention scale folded in)
#   [ 64 .. 127]  K columns of in-proj
#   [128 .. 131]  per-head  W_v_h @ w_fused_h  (V folded through out_proj->fc1->fc2)
#   [132 .. 255]  zero padding (keeps the lane dim a multiple of 128)
_Q_COL = 0
_K_COL = MODEL_DIM
_VW_COL = 2 * MODEL_DIM
_N_COLS = 2 * MODEL_DIM + NUM_HEADS    # 132 real columns
_SLAB_COLS = 256


def recipe_kernel(ids_ref, emb_ref, out_ref, *, sizes, offsets, bias_row):
    """ids_ref: (B,4) int32 raw ids; emb_ref: (NROWS,256) folded slab; out_ref: (1,B)."""
    B = ids_ref.shape[0]
    n_rows = emb_ref.shape[0]

    # ---- embedding lookup + concat + QKV in-projection as ONE one-hot matmul ----
    # Each emb_proj row is (slot-placed table row) @ [Wq*scale | Wk | Wv@w_fused],
    # so summing one row per table (+ the always-hot bias row) == x @ W_in + bias.
    ids = ids_ref[...]                                               # (B, 4) int32
    col = lax.broadcasted_iota(jnp.int32, (B, n_rows), 1)
    hot = col == bias_row                                            # bias row always hot
    for t in range(4):                                               # static: 4 tables
        idt = jnp.clip(ids[:, t:t + 1], 0, sizes[t] - 1) + offsets[t]   # (B, 1)
        hot = hot | (col == idt)
    onehot = hot.astype(jnp.float32)                                 # (B, NROWS)
    qkv = jnp.dot(onehot, emb_ref[...],
                  preferred_element_type=jnp.float32)                # (B, 256)

    # ---- 4-head self-attention over the batch axis + fused linear tail ---------
    # Scores built transposed (keys on sublanes, queries on lanes): the QK matmul
    # is the native trans_b contraction (no .T), softmax stats are cross-sublane
    # reductions (XLU), the folded V-tail column (B,1) broadcasts over lanes, and
    # the accumulator / output is lane-dense (1, B).
    acc = jnp.zeros((1, B), jnp.float32)
    for h in range(NUM_HEADS):                                       # static: 4 heads
        lo = h * HEAD_DIM
        qh = qkv[:, _Q_COL + lo:_Q_COL + lo + HEAD_DIM]              # (B, 16), pre-scaled
        kh = qkv[:, _K_COL + lo:_K_COL + lo + HEAD_DIM]              # (B, 16)
        vw = qkv[:, _VW_COL + h:_VW_COL + h + 1]                     # (B, 1)
        s_t = lax.dot_general(kh, qh, (((1,), (1,)), ((), ())),
                              preferred_element_type=jnp.float32)    # (B, B) [key, query]
        s_t = s_t - jnp.max(s_t, axis=0, keepdims=True)
        p = jnp.exp(s_t)
        r = pl.reciprocal(jnp.sum(p, axis=0, keepdims=True), approx=True)   # (1, B)
        acc = acc + jnp.sum(p * vw, axis=0, keepdims=True) * r              # (1, B)

    out_ref[...] = 5.0 * jax.nn.sigmoid(acc)                         # (1, B)


def pack_params(params):
    """One-time offline repack: all weights folded into a single (NROWS,256) slab."""
    nr = params["recipe_emb"].shape[0]
    na = params["author_emb"].shape[0]
    mc = params["calorie_emb"].shape[0]
    mrc = params["review_emb"].shape[0]
    n_total = nr + na + mc + mrc
    sizes = (nr, na, mc, mrc)
    offsets = (0, nr, nr + na, nr + na + mc)
    bias_row = n_total
    n_rows = ((n_total + 1 + 7) // 8) * 8                            # pad to sublane mult.

    d = MODEL_DIM
    scale = 1.0 / (HEAD_DIM ** 0.5)

    # torch stores Linear / in_proj weights as (out, in); transpose once here.
    w_in_t = params["w_in"].astype(jnp.float32).T                    # (64, 192)
    b_in = params["b_in"].astype(jnp.float32)                        # (192,)
    w_q_t, b_q = w_in_t[:, 0:d] * scale, b_in[0:d] * scale           # scale folded into Q
    w_k_t, b_k = w_in_t[:, d:2 * d], b_in[d:2 * d]
    w_v_t, b_v = w_in_t[:, 2 * d:3 * d], b_in[2 * d:3 * d]

    # Fold out_proj -> fc1 -> fc2 (all linear; sigmoid only comes after fc2).
    w_out_t = params["w_out"].astype(jnp.float32).T                  # (64, 64)
    w1_t = params["w1"].astype(jnp.float32).T                        # (64, 16)
    w2_t = params["w2"].astype(jnp.float32).T                        # (16, 1)
    w_fused = (w_out_t @ w1_t @ w2_t)[:, 0]                          # (64,)
    b_fused = ((params["b_out"].astype(jnp.float32) @ w1_t
                + params["b1"].astype(jnp.float32)) @ w2_t
               + params["b2"].astype(jnp.float32))[0]                # scalar

    # Fold the fused tail through V: one column per head.  The V bias and
    # b_fused ride along the always-hot bias row (softmax rows sum to 1).
    w_vw = jnp.stack(
        [w_v_t[:, h * HEAD_DIM:(h + 1) * HEAD_DIM]
         @ w_fused[h * HEAD_DIM:(h + 1) * HEAD_DIM] for h in range(NUM_HEADS)],
        axis=1)                                                      # (64, 4)
    b_vw = jnp.stack(
        [b_v[h * HEAD_DIM:(h + 1) * HEAD_DIM]
         @ w_fused[h * HEAD_DIM:(h + 1) * HEAD_DIM] for h in range(NUM_HEADS)]
    ) + b_fused / NUM_HEADS                                          # (4,)

    proj = jnp.concatenate([w_q_t, w_k_t, w_vw], axis=1)             # (64, 132)
    bias_cols = jnp.concatenate([b_q, b_k, b_vw])                    # (132,)

    # Block-diagonal embedding: each table in its own row range / 16-col slot,
    # then folded through `proj` so one-hot @ slab == qkv directly.
    emb = jnp.zeros((n_total, d), jnp.float32)
    emb = emb.at[0:nr, 0:EMBEDDING_DIM].set(params["recipe_emb"].astype(jnp.float32))
    emb = emb.at[nr:nr + na, EMBEDDING_DIM:2 * EMBEDDING_DIM].set(
        params["author_emb"].astype(jnp.float32))
    emb = emb.at[nr + na:nr + na + mc, 2 * EMBEDDING_DIM:3 * EMBEDDING_DIM].set(
        params["calorie_emb"].astype(jnp.float32))
    emb = emb.at[nr + na + mc:n_total, 3 * EMBEDDING_DIM:4 * EMBEDDING_DIM].set(
        params["review_emb"].astype(jnp.float32))

    slab = jnp.zeros((n_rows, _SLAB_COLS), jnp.float32)
    slab = slab.at[0:n_total, 0:_N_COLS].set(emb @ proj)
    slab = slab.at[bias_row, 0:_N_COLS].set(bias_cols)

    return {"emb_proj": slab, "sizes": sizes, "offsets": offsets, "bias_row": bias_row}


def make_recipe_forward(packed):
    """Returns a jitted forward (one dispatch per call); slab + constants are baked in."""
    emb = packed["emb_proj"]
    kernel = functools.partial(recipe_kernel, sizes=packed["sizes"],
                               offsets=packed["offsets"], bias_row=packed["bias_row"])

    @jax.jit
    def forward(recipe_id, author_id, calories, review_counts):
        ids = jnp.stack([recipe_id, author_id, calories, review_counts],
                        axis=-1).astype(jnp.int32)                   # (B, 4)
        B = ids.shape[0]
        out = pl.pallas_call(
            kernel,
            out_shape=jax.ShapeDtypeStruct((1, B), jnp.float32),
            in_specs=[
                pl.BlockSpec(ids.shape, lambda *_: (0, 0)),
                pl.BlockSpec(emb.shape, lambda *_: (0, 0)),
            ],
            out_specs=pl.BlockSpec((1, B), lambda *_: (0, 0)),
        )(ids, emb)
        return out.reshape(-1)                                       # (B,)

    return forward


def init_params(key, num_recipes, num_authors, max_calories, max_review_counts):
    ks = jax.random.split(key, 12)
    d = MODEL_DIM
    return {
        # embedding tables: N(0, 1), like torch.nn.Embedding default
        "recipe_emb": jax.random.normal(ks[0], (num_recipes, EMBEDDING_DIM), jnp.float32),
        "author_emb": jax.random.normal(ks[1], (num_authors, EMBEDDING_DIM), jnp.float32),
        "calorie_emb": jax.random.normal(ks[2], (max_calories, EMBEDDING_DIM), jnp.float32),
        "review_emb": jax.random.normal(ks[3], (max_review_counts, EMBEDDING_DIM), jnp.float32),
        # MultiheadAttention: in_proj (3E, E), out_proj (E, E)  (torch stores (out, in))
        "w_in":  jax.random.normal(ks[4], (3 * d, d), jnp.float32) * (1.0 / jnp.sqrt(d)),
        "b_in":  jnp.zeros((3 * d,), jnp.float32),
        "w_out": jax.random.normal(ks[5], (d, d), jnp.float32) * (1.0 / jnp.sqrt(d)),
        "b_out": jnp.zeros((d,), jnp.float32),
        # fc1: (16, 64), fc2: (1, 16)
        "w1": jax.random.normal(ks[6], (FC1_DIM, d), jnp.float32) * (1.0 / jnp.sqrt(d)),
        "b1": jax.random.normal(ks[7], (FC1_DIM,), jnp.float32) * 0.01,
        "w2": jax.random.normal(ks[8], (1, FC1_DIM), jnp.float32) * (1.0 / jnp.sqrt(FC1_DIM)),
        "b2": jax.random.normal(ks[9], (1,), jnp.float32) * 0.01,
    }


def reference_forward(params, recipe_id, author_id, calories, review_counts):
    """Pure-JAX mirror of the PyTorch module (unfused), for correctness checking."""
    x = jnp.concatenate([params["recipe_emb"][recipe_id],
                         params["author_emb"][author_id],
                         params["calorie_emb"][calories],
                         params["review_emb"][review_counts]], axis=-1)      # (B, 64)
    d, hd = MODEL_DIM, HEAD_DIM
    scale = 1.0 / (hd ** 0.5)
    qkv = x @ params["w_in"].T + params["b_in"]
    q, k, v = qkv[:, :d], qkv[:, d:2 * d], qkv[:, 2 * d:]
    heads = []
    for h in range(NUM_HEADS):
        qh = q[:, h * hd:(h + 1) * hd] * scale
        kh = k[:, h * hd:(h + 1) * hd]
        vh = v[:, h * hd:(h + 1) * hd]
        p = jax.nn.softmax(qh @ kh.T, axis=-1)
        heads.append(p @ vh)
    attn = jnp.concatenate(heads, axis=-1) @ params["w_out"].T + params["b_out"]
    y = attn @ params["w1"].T + params["b1"]
    y = y @ params["w2"].T + params["b2"]
    return (5.0 * jax.nn.sigmoid(y)).reshape(-1)


if __name__ == "__main__":
    key = jax.random.PRNGKey(0)
    k_param, k_r, k_a, k_c, k_rc = jax.random.split(key, 5)

    NUM_RECIPES = 32
    NUM_AUTHORS = 16
    MAX_CALORIES = 64
    MAX_REVIEW_COUNTS = 50
    BATCH = 8

    params = init_params(k_param, NUM_RECIPES, NUM_AUTHORS, MAX_CALORIES, MAX_REVIEW_COUNTS)
    packed = pack_params(params)             # one-time offline fold + repack
    forward = make_recipe_forward(packed)

    recipe_id = jax.random.randint(k_r, (BATCH,), 0, NUM_RECIPES, dtype=jnp.int32)
    author_id = jax.random.randint(k_a, (BATCH,), 0, NUM_AUTHORS, dtype=jnp.int32)
    calories = jax.random.randint(k_c, (BATCH,), 0, MAX_CALORIES, dtype=jnp.int32)
    review_counts = jax.random.randint(k_rc, (BATCH,), 0, MAX_REVIEW_COUNTS, dtype=jnp.int32)

    out = forward(recipe_id, author_id, calories, review_counts)
    out = jax.block_until_ready(out)
    ref = reference_forward(params, recipe_id, author_id, calories, review_counts)

    assert out.shape == (BATCH,), out.shape
    assert bool(jnp.all(jnp.isfinite(out)))
    assert bool(jnp.all((out >= 0.0) & (out <= 5.0)))
    # Loose tolerance covers pl.reciprocal(approx=True) in the softmax denominator.
    assert bool(jnp.allclose(out, ref, atol=1e-2, rtol=1e-2)), (out, ref)
    print("KERNEL_OK")
</pallas_src>

<mosaic_0001>
module attributes {stable_mosaic.version = 11 : i64} {
  func.func @recipe_kernel(%arg0: memref<8x4xi32, #tpu.memory_space<vmem>>, %arg1: memref<168x256xf32, #tpu.memory_space<vmem>>, %arg2: memref<1x8xf32, #tpu.memory_space<vmem>>) attributes {dimension_semantics = [], scalar_prefetch = 0 : i64, scratch_operands = 0 : i64, tpu.core_type = #tpu.core_type<tc>} {
    %c0 = arith.constant 0 : index
    %c0_0 = arith.constant 0 : index
    %0 = vector.load %arg0[%c0, %c0_0] : memref<8x4xi32, #tpu.memory_space<vmem>>, vector<8x4xi32>
    %1 = tpu.iota {dimensions = array<i32: 1>} : vector<8x168xi32>
    %c162_i32 = arith.constant 162 : i32
    %2 = vector.broadcast %c162_i32 : i32 to vector<8x168xi32>
    %3 = arith.cmpi eq, %1, %2 : vector<8x168xi32>
    %4 = vector.extract_strided_slice %0 {offsets = [0, 0], sizes = [8, 1], strides = [1, 1]} : vector<8x4xi32> to vector<8x1xi32>
    %c0_i32 = arith.constant 0 : i32
    %c31_i32 = arith.constant 31 : i32
    %5 = vector.broadcast %c0_i32 : i32 to vector<8x1xi32>
    %6 = arith.maxsi %5, %4 : vector<8x1xi32>
    %7 = vector.broadcast %c31_i32 : i32 to vector<8x1xi32>
    %8 = arith.minsi %7, %6 : vector<8x1xi32>
    %c0_i32_1 = arith.constant 0 : i32
    %9 = vector.broadcast %c0_i32_1 : i32 to vector<8x1xi32>
    %10 = arith.addi %8, %9 : vector<8x1xi32>
    %11 = vector.broadcast %10 : vector<8x1xi32> to vector<8x168xi32>
    %12 = arith.cmpi eq, %1, %11 : vector<8x168xi32>
    %13 = arith.ori %3, %12 : vector<8x168xi1>
    %14 = vector.extract_strided_slice %0 {offsets = [0, 1], sizes = [8, 1], strides = [1, 1]} : vector<8x4xi32> to vector<8x1xi32>
    %c0_i32_2 = arith.constant 0 : i32
    %c15_i32 = arith.constant 15 : i32
    %15 = vector.broadcast %c0_i32_2 : i32 to vector<8x1xi32>
    %16 = arith.maxsi %15, %14 : vector<8x1xi32>
    %17 = vector.broadcast %c15_i32 : i32 to vector<8x1xi32>
    %18 = arith.minsi %17, %16 : vector<8x1xi32>
    %c32_i32 = arith.constant 32 : i32
    %19 = vector.broadcast %c32_i32 : i32 to vector<8x1xi32>
    %20 = arith.addi %18, %19 : vector<8x1xi32>
    %21 = vector.broadcast %20 : vector<8x1xi32> to vector<8x168xi32>
    %22 = arith.cmpi eq, %1, %21 : vector<8x168xi32>
    %23 = arith.ori %13, %22 : vector<8x168xi1>
    %24 = vector.extract_strided_slice %0 {offsets = [0, 2], sizes = [8, 1], strides = [1, 1]} : vector<8x4xi32> to vector<8x1xi32>
    %c0_i32_3 = arith.constant 0 : i32
    %c63_i32 = arith.constant 63 : i32
    %25 = vector.broadcast %c0_i32_3 : i32 to vector<8x1xi32>
    %26 = arith.maxsi %25, %24 : vector<8x1xi32>
    %27 = vector.broadcast %c63_i32 : i32 to vector<8x1xi32>
    %28 = arith.minsi %27, %26 : vector<8x1xi32>
    %c48_i32 = arith.constant 48 : i32
    %29 = vector.broadcast %c48_i32 : i32 to vector<8x1xi32>
    %30 = arith.addi %28, %29 : vector<8x1xi32>
    %31 = vector.broadcast %30 : vector<8x1xi32> to vector<8x168xi32>
    %32 = arith.cmpi eq, %1, %31 : vector<8x168xi32>
    %33 = arith.ori %23, %32 : vector<8x168xi1>
    %34 = vector.extract_strided_slice %0 {offsets = [0, 3], sizes = [8, 1], strides = [1, 1]} : vector<8x4xi32> to vector<8x1xi32>
    %c0_i32_4 = arith.constant 0 : i32
    %c49_i32 = arith.constant 49 : i32
    %35 = vector.broadcast %c0_i32_4 : i32 to vector<8x1xi32>
    %36 = arith.maxsi %35, %34 : vector<8x1xi32>
    %37 = vector.broadcast %c49_i32 : i32 to vector<8x1xi32>
    %38 = arith.minsi %37, %36 : vector<8x1xi32>
    %c112_i32 = arith.constant 112 : i32
    %39 = vector.broadcast %c112_i32 : i32 to vector<8x1xi32>
    %40 = arith.addi %38, %39 : vector<8x1xi32>
    %41 = vector.broadcast %40 : vector<8x1xi32> to vector<8x168xi32>
    %42 = arith.cmpi eq, %1, %41 : vector<8x168xi32>
    %43 = arith.ori %33, %42 : vector<8x168xi1>
    %44 = arith.extui %43 : vector<8x168xi1> to vector<8x168xi32>
    %45 = arith.sitofp %44 : vector<8x168xi32> to vector<8x168xf32>
    %c0_5 = arith.constant 0 : index
    %c0_6 = arith.constant 0 : index
    %46 = vector.load %arg1[%c0_5, %c0_6] : memref<168x256xf32, #tpu.memory_space<vmem>>, vector<168x256xf32>
    %cst = arith.constant dense<0.000000e+00> : vector<8x256xf32>
    %47 = tpu.matmul %45, %46, %cst {dimension_numbers = #tpu.dot_dimension_numbers<[1], [0], [0], [1], [0, 0, 1, 1], [], []>} : vector<8x168xf32>, vector<168x256xf32>, vector<8x256xf32> -> vector<8x256xf32>
    %cst_7 = arith.constant 0.000000e+00 : f32
    %48 = vector.broadcast %cst_7 : f32 to vector<1x8xf32>
    %49 = vector.extract_strided_slice %47 {offsets = [0, 0], sizes = [8, 16], strides = [1, 1]} : vector<8x256xf32> to vector<8x16xf32>
    %50 = vector.extract_strided_slice %47 {offsets = [0, 64], sizes = [8, 16], strides = [1, 1]} : vector<8x256xf32> to vector<8x16xf32>
    %51 = vector.extract_strided_slice %47 {offsets = [0, 128], sizes = [8, 1], strides = [1, 1]} : vector<8x256xf32> to vector<8x1xf32>
    %cst_8 = arith.constant dense<0.000000e+00> : vector<8x8xf32>
    %52 = tpu.matmul %50, %49, %cst_8 {dimension_numbers = #tpu.dot_dimension_numbers<[1], [1], [0], [0], [0, 0, 1, 0], [], []>} : vector<8x16xf32>, vector<8x16xf32>, vector<8x8xf32> -> vector<8x8xf32>
    %cst_9 = arith.constant dense<0xFF800000> : vector<8xf32>
    %53 = vector.multi_reduction <maximumf>, %52, %cst_9 [0] : vector<8x8xf32> to vector<8xf32>
    %54 = vector.shape_cast %53 : vector<8xf32> to vector<1x8xf32>
    %55 = vector.broadcast %54 : vector<1x8xf32> to vector<8x8xf32>
    %56 = arith.subf %52, %55 : vector<8x8xf32>
    %57 = math.exp %56 : vector<8x8xf32>
    %cst_10 = arith.constant dense<0.000000e+00> : vector<8xf32>
    %58 = vector.multi_reduction <add>, %57, %cst_10 [0] : vector<8x8xf32> to vector<8xf32>
    %59 = vector.shape_cast %58 : vector<8xf32> to vector<1x8xf32>
    %60 = tpu.reciprocal %59 {approx = true} : vector<1x8xf32> -> vector<1x8xf32>
    %61 = vector.broadcast %51 : vector<8x1xf32> to vector<8x8xf32>
    %62 = arith.mulf %57, %61 : vector<8x8xf32>
    %cst_11 = arith.constant dense<0.000000e+00> : vector<8xf32>
    %63 = vector.multi_reduction <add>, %62, %cst_11 [0] : vector<8x8xf32> to vector<8xf32>
    %64 = vector.shape_cast %63 : vector<8xf32> to vector<1x8xf32>
    %65 = arith.mulf %64, %60 : vector<1x8xf32>
    %66 = arith.addf %48, %65 : vector<1x8xf32>
    %67 = vector.extract_strided_slice %47 {offsets = [0, 16], sizes = [8, 16], strides = [1, 1]} : vector<8x256xf32> to vector<8x16xf32>
    %68 = vector.extract_strided_slice %47 {offsets = [0, 80], sizes = [8, 16], strides = [1, 1]} : vector<8x256xf32> to vector<8x16xf32>
    %69 = vector.extract_strided_slice %47 {offsets = [0, 129], sizes = [8, 1], strides = [1, 1]} : vector<8x256xf32> to vector<8x1xf32>
    %cst_12 = arith.constant dense<0.000000e+00> : vector<8x8xf32>
    %70 = tpu.matmul %68, %67, %cst_12 {dimension_numbers = #tpu.dot_dimension_numbers<[1], [1], [0], [0], [0, 0, 1, 0], [], []>} : vector<8x16xf32>, vector<8x16xf32>, vector<8x8xf32> -> vector<8x8xf32>
    %cst_13 = arith.constant dense<0xFF800000> : vector<8xf32>
    %71 = vector.multi_reduction <maximumf>, %70, %cst_13 [0] : vector<8x8xf32> to vector<8xf32>
    %72 = vector.shape_cast %71 : vector<8xf32> to vector<1x8xf32>
    %73 = vector.broadcast %72 : vector<1x8xf32> to vector<8x8xf32>
    %74 = arith.subf %70, %73 : vector<8x8xf32>
    %75 = math.exp %74 : vector<8x8xf32>
    %cst_14 = arith.constant dense<0.000000e+00> : vector<8xf32>
    %76 = vector.multi_reduction <add>, %75, %cst_14 [0] : vector<8x8xf32> to vector<8xf32>
    %77 = vector.shape_cast %76 : vector<8xf32> to vector<1x8xf32>
    %78 = tpu.reciprocal %77 {approx = true} : vector<1x8xf32> -> vector<1x8xf32>
    %79 = vector.broadcast %69 : vector<8x1xf32> to vector<8x8xf32>
    %80 = arith.mulf %75, %79 : vector<8x8xf32>
    %cst_15 = arith.constant dense<0.000000e+00> : vector<8xf32>
    %81 = vector.multi_reduction <add>, %80, %cst_15 [0] : vector<8x8xf32> to vector<8xf32>
    %82 = vector.shape_cast %81 : vector<8xf32> to vector<1x8xf32>
    %83 = arith.mulf %82, %78 : vector<1x8xf32>
    %84 = arith.addf %66, %83 : vector<1x8xf32>
    %85 = vector.extract_strided_slice %47 {offsets = [0, 32], sizes = [8, 16], strides = [1, 1]} : vector<8x256xf32> to vector<8x16xf32>
    %86 = vector.extract_strided_slice %47 {offsets = [0, 96], sizes = [8, 16], strides = [1, 1]} : vector<8x256xf32> to vector<8x16xf32>
    %87 = vector.extract_strided_slice %47 {offsets = [0, 130], sizes = [8, 1], strides = [1, 1]} : vector<8x256xf32> to vector<8x1xf32>
    %cst_16 = arith.constant dense<0.000000e+00> : vector<8x8xf32>
    %88 = tpu.matmul %86, %85, %cst_16 {dimension_numbers = #tpu.dot_dimension_numbers<[1], [1], [0], [0], [0, 0, 1, 0], [], []>} : vector<8x16xf32>, vector<8x16xf32>, vector<8x8xf32> -> vector<8x8xf32>
    %cst_17 = arith.constant dense<0xFF800000> : vector<8xf32>
    %89 = vector.multi_reduction <maximumf>, %88, %cst_17 [0] : vector<8x8xf32> to vector<8xf32>
    %90 = vector.shape_cast %89 : vector<8xf32> to vector<1x8xf32>
    %91 = vector.broadcast %90 : vector<1x8xf32> to vector<8x8xf32>
    %92 = arith.subf %88, %91 : vector<8x8xf32>
    %93 = math.exp %92 : vector<8x8xf32>
    %cst_18 = arith.constant dense<0.000000e+00> : vector<8xf32>
    %94 = vector.multi_reduction <add>, %93, %cst_18 [0] : vector<8x8xf32> to vector<8xf32>
    %95 = vector.shape_cast %94 : vector<8xf32> to vector<1x8xf32>
    %96 = tpu.reciprocal %95 {approx = true} : vector<1x8xf32> -> vector<1x8xf32>
    %97 = vector.broadcast %87 : vector<8x1xf32> to vector<8x8xf32>
    %98 = arith.mulf %93, %97 : vector<8x8xf32>
    %cst_19 = arith.constant dense<0.000000e+00> : vector<8xf32>
    %99 = vector.multi_reduction <add>, %98, %cst_19 [0] : vector<8x8xf32> to vector<8xf32>
    %100 = vector.shape_cast %99 : vector<8xf32> to vector<1x8xf32>
    %101 = arith.mulf %100, %96 : vector<1x8xf32>
    %102 = arith.addf %84, %101 : vector<1x8xf32>
    %103 = vector.extract_strided_slice %47 {offsets = [0, 48], sizes = [8, 16], strides = [1, 1]} : vector<8x256xf32> to vector<8x16xf32>
    %104 = vector.extract_strided_slice %47 {offsets = [0, 112], sizes = [8, 16], strides = [1, 1]} : vector<8x256xf32> to vector<8x16xf32>
    %105 = vector.extract_strided_slice %47 {offsets = [0, 131], sizes = [8, 1], strides = [1, 1]} : vector<8x256xf32> to vector<8x1xf32>
    %cst_20 = arith.constant dense<0.000000e+00> : vector<8x8xf32>
    %106 = tpu.matmul %104, %103, %cst_20 {dimension_numbers = #tpu.dot_dimension_numbers<[1], [1], [0], [0], [0, 0, 1, 0], [], []>} : vector<8x16xf32>, vector<8x16xf32>, vector<8x8xf32> -> vector<8x8xf32>
    %cst_21 = arith.constant dense<0xFF800000> : vector<8xf32>
    %107 = vector.multi_reduction <maximumf>, %106, %cst_21 [0] : vector<8x8xf32> to vector<8xf32>
    %108 = vector.shape_cast %107 : vector<8xf32> to vector<1x8xf32>
    %109 = vector.broadcast %108 : vector<1x8xf32> to vector<8x8xf32>
    %110 = arith.subf %106, %109 : vector<8x8xf32>
    %111 = math.exp %110 : vector<8x8xf32>
    %cst_22 = arith.constant dense<0.000000e+00> : vector<8xf32>
    %112 = vector.multi_reduction <add>, %111, %cst_22 [0] : vector<8x8xf32> to vector<8xf32>
    %113 = vector.shape_cast %112 : vector<8xf32> to vector<1x8xf32>
    %114 = tpu.reciprocal %113 {approx = true} : vector<1x8xf32> -> vector<1x8xf32>
    %115 = vector.broadcast %105 : vector<8x1xf32> to vector<8x8xf32>
    %116 = arith.mulf %111, %115 : vector<8x8xf32>
    %cst_23 = arith.constant dense<0.000000e+00> : vector<8xf32>
    %117 = vector.multi_reduction <add>, %116, %cst_23 [0] : vector<8x8xf32> to vector<8xf32>
    %118 = vector.shape_cast %117 : vector<8xf32> to vector<1x8xf32>
    %119 = arith.mulf %118, %114 : vector<1x8xf32>
    %120 = arith.addf %102, %119 : vector<1x8xf32>
    %121 = arith.negf %120 : vector<1x8xf32>
    %122 = math.exp %121 : vector<1x8xf32>
    %cst_24 = arith.constant 1.000000e+00 : f32
    %123 = vector.broadcast %cst_24 : f32 to vector<1x8xf32>
    %124 = arith.addf %123, %122 : vector<1x8xf32>
    %125 = arith.divf %123, %124 : vector<1x8xf32>
    %cst_25 = arith.constant 5.000000e+00 : f32
    %126 = vector.broadcast %cst_25 : f32 to vector<1x8xf32>
    %127 = arith.mulf %126, %125 : vector<1x8xf32>
    %c0_26 = arith.constant 0 : index
    %c0_27 = arith.constant 0 : index
    %128 = vector.load %arg2[%c0_26, %c0_27] : memref<1x8xf32, #tpu.memory_space<vmem>>, vector<1x8xf32>
    tpu.vector_store %arg2[%c0_26, %c0_27], %127 {strides = array<i32>} : memref<1x8xf32, #tpu.memory_space<vmem>>, vector<1x8xf32>,
    return
  }
}

</mosaic_0001>

<llo_original>
// kernel: forward.1
$region0: #{forward.1}
  #allocation0 [shape = 'u32[]', space=smem, size = 0x4, offset = 0x4, fixed_abs, tag = 'smem constant byte address 0x4 - core index']
  #allocation1 [shape = 'u32[144,128]{1,0:T(1,128)}', space=vmem, size = 0x12000, scoped, tag = 'internal scratch']
  %s0 = inlined_call_operand.vmem [shape: s32[8,4], index: 0, kind: input, shape index: {}]
  %s1 = inlined_call_operand.hbm [shape: f32[168,256], index: 1, kind: input, shape index: {}]
  %s2 = inlined_call_operand.hbm [shape: f32[1,8], index: 2, kind: output, shape index: {}]
  %s3 = sld [smem:[#allocation0]]
  $region22: #{forward.1} parent=0
    _
  %s5 = ssub.s32 1, %s3
  %s6 = scalar_select 0, %s5, %s3
  $region1: #{forward.1} parent=0
    #allocation2 [shape = 'u8[172032]{0}', space=vmem, size = 0x2a000, scoped, tag = 'input window, operand 1, single buffered']
    #allocation3 [shape = 's32[1]{0}', space=sflag, size = 0x4, scoped, tag = 'scoped memory for forward.1']
    #allocation4 [shape = 's32[1]{0}', space=sflag, size = 0x4, scoped, tag = 'scoped memory for forward.1']
    #allocation5 [shape = 'u8[512]{0}', space=vmem, size = 0x400, scoped, tag = 'output window, operand 0, single buffered']
    %7 = vsyncpa [#allocation3], 0
    %8 = vsyncpa [#allocation4], 0
    // Predicated region
    $region2: #{forward.1} parent=1 // pred_check
      _
    $region3: #{forward.1} parent=1 // pred_check_branch
      %10 = sbr.rel (0) target = $region5
    $region4: #{forward.1} parent=1 // pred_region
      _
    $region5: #{forward.1} parent=1 // pred_fallthru
      _
    // Predicated region
    $region6: #{forward.1} parent=1 // pred_check
      _
    $region7: #{forward.1} parent=1 // pred_check_branch
      %12 = sbr.rel (0) target = $region9
    $region8: #{forward.1} parent=1 // pred_region
      %s14 = ssub.s32 5376, 5376
      %15 = vsyncadd [#allocation3], %s14
      %s16 = sshll.u32 [#allocation2], 4
      %s17 = int_to_ptr.vmem [resolvable:$true] %s16
      %22 = dma.hbm_to_vmem [thread:$0]  %s1, 5376, %s17, [#allocation3], 256, 256, 16
    $region9: #{forward.1} parent=1 // pred_fallthru
      _
    // Predicated region
    $region10: #{forward.1} parent=1 // pred_check
      _
    $region11: #{forward.1} parent=1 // pred_check_branch
      %24 = sbr.rel (0) target = $region13
    $region12: #{forward.1} parent=1 // pred_region
      %25 = dma.done [#allocation3], 5376
    $region13: #{forward.1} parent=1 // pred_fallthru
      _
    %v26 = vld [vmem:[%s0] sm:$0xff]
    %v27 = vlaneseq
    %v28 = vand.u32 %v27, 127
    %v29 = vadd.s32 %v28, 128
    %vm30 = vcmp.eq.s32.totalorder %v28, 162
    %vm31 = vcmp.eq.s32.totalorder %v29, 162
    %vm32 = vcmp.gt.s32.totalorder %v26, 0
    %v33 = vsel %vm32, %v26, 0
    %vm34 = vcmp.lt.s32.totalorder %v33, 31
    %v35 = vsel %vm34, %v33, 31
    %36 = vset.pattern.permute.xlu0 0
    %37 = vperm.xlu0 %36, %v35
    %v38 = vpop.permute.xlu0 %37
    %vm39 = vcmp.eq.s32.totalorder %v28, %v38
    %vm40 = vcmp.eq.s32.totalorder %v29, %v38
    %vm41 = vmor %vm30, %vm39
    %vm42 = vmor %vm31, %vm40
    %vm43 = vcmp.lt.s32.totalorder %v33, 15
    %v44 = vsel %vm43, %v33, 15
    %v45 = vadd.s32 %v44, 32
    %46 = vset.pattern.permute.xlu0 1
    %47 = vperm.xlu0 %46, %v45
    %v48 = vpop.permute.xlu0 %47
    %vm49 = vcmp.eq.s32.totalorder %v28, %v48
    %vm50 = vcmp.eq.s32.totalorder %v29, %v48
    %vm51 = vmor %vm41, %vm49
    %vm52 = vmor %vm42, %vm50
    %vm53 = vcmp.lt.s32.totalorder %v33, 63
    %v54 = vsel %vm53, %v33, 63
    %v55 = vadd.s32 %v54, 48
    %56 = vset.pattern.permute.xlu0 2
    %57 = vperm.xlu0 %56, %v55
    %v58 = vpop.permute.xlu0 %57
    %vm59 = vcmp.eq.s32.totalorder %v28, %v58
    %vm60 = vcmp.eq.s32.totalorder %v29, %v58
    %vm61 = vmor %vm51, %vm59
    %vm62 = vmor %vm52, %vm60
    %vm63 = vcmp.lt.s32.totalorder %v33, 49
    %v64 = vsel %vm63, %v33, 49
    %v65 = vadd.s32 %v64, 112
    %66 = vset.pattern.permute.xlu0 3
    %67 = vperm.xlu0 %66, %v65
    %v68 = vpop.permute.xlu0 %67
    %vm69 = vcmp.eq.s32.totalorder %v28, %v68
    %vm70 = vcmp.eq.s32.totalorder %v29, %v68
    %vm71 = vmor %vm61, %vm69
    %vm72 = vmor %vm62, %vm70
    %v73 = vsel %vm71, 1, 0
    %v74 = vsel %vm72, 1, 0
    %v75 = vcvt.s32.f32 %v73
    %v76 = vcvt.s32.f32 %v74
    %v77 = vld [vmem:[#allocation2] sm:$0xff]
    %v78 = vld [vmem:[#allocation2 + $0x8] sm:$0xff]
    %v79 = vld [vmem:[#allocation2 + $0x10] sm:$0xff]
    %v80 = vld [vmem:[#allocation2 + $0x18] sm:$0xff]
    %v81 = vld [vmem:[#allocation2 + $0x20] sm:$0xff]
    %v82 = vld [vmem:[#allocation2 + $0x28] sm:$0xff]
    %v83 = vld [vmem:[#allocation2 + $0x30] sm:$0xff]
    %v84 = vld [vmem:[#allocation2 + $0x38] sm:$0xff]
    %v85 = vld [vmem:[#allocation2 + $0x40] sm:$0xff]
    %v86 = vld [vmem:[#allocation2 + $0x48] sm:$0xff]
    %v87 = vld [vmem:[#allocation2 + $0x50] sm:$0xff]
    %v88 = vld [vmem:[#allocation2 + $0x58] sm:$0xff]
    %v89 = vld [vmem:[#allocation2 + $0x60] sm:$0xff]
    %v90 = vld [vmem:[#allocation2 + $0x68] sm:$0xff]
    %v91 = vld [vmem:[#allocation2 + $0x70] sm:$0xff]
    %v92 = vld [vmem:[#allocation2 + $0x78] sm:$0xff]
    %v93 = vld [vmem:[#allocation2 + $0x80] sm:$0xff]
    %v94 = vld [vmem:[#allocation2 + $0x88] sm:$0xff]
    %v95 = vld [vmem:[#allocation2 + $0x90] sm:$0xff]
    %v96 = vld [vmem:[#allocation2 + $0x98] sm:$0xff]
    %v97 = vld [vmem:[#allocation2 + $0xa0] sm:$0xff]
    %v98 = vld [vmem:[#allocation2 + $0xa8] sm:$0xff]
    %v99 = vld [vmem:[#allocation2 + $0xb0] sm:$0xff]
    %v100 = vld [vmem:[#allocation2 + $0xb8] sm:$0xff]
    %v101 = vld [vmem:[#allocation2 + $0xc0] sm:$0xff]
    %v102 = vld [vmem:[#allocation2 + $0xc8] sm:$0xff]
    %v103 = vld [vmem:[#allocation2 + $0xd0] sm:$0xff]
    %v104 = vld [vmem:[#allocation2 + $0xd8] sm:$0xff]
    %v105 = vld [vmem:[#allocation2 + $0xe0] sm:$0xff]
    %v106 = vld [vmem:[#allocation2 + $0xe8] sm:$0xff]
    %v107 = vld [vmem:[#allocation2 + $0xf0] sm:$0xff]
    %v108 = vld [vmem:[#allocation2 + $0xf8] sm:$0xff]
    %v109 = vld [vmem:[#allocation2 + $0x100] sm:$0xff]
    %v110 = vld [vmem:[#allocation2 + $0x108] sm:$0xff]
    %v111 = vld [vmem:[#allocation2 + $0x110] sm:$0xff]
    %v112 = vld [vmem:[#allocation2 + $0x118] sm:$0xff]
    %v113 = vld [vmem:[#allocation2 + $0x120] sm:$0xff]
    %v114 = vld [vmem:[#allocation2 + $0x128] sm:$0xff]
    %v115 = vld [vmem:[#allocation2 + $0x130] sm:$0xff]
    %v116 = vld [vmem:[#allocation2 + $0x138] sm:$0xff]
    %v117 = vld [vmem:[#allocation2 + $0x140] sm:$0xff]
    %v118 = vld [vmem:[#allocation2 + $0x148] sm:$0xff]
    %vm119 = vcmask 326656
    %v121 = vsel %vm119, %v76, 0
    %123 = vmatprep.subr.mxu0 %v78
    %124 = vmatpush1.msra.mxu0 %v77
    %125 = vmatprep.subr.mxu0 %v80
    %126 = vmatpush1.msra.mxu0 %v79
    %127 = vmatprep.subr.mxu0 %v82
    %128 = vmatpush1.msra.mxu0 %v81
    %129 = vmatprep.subr.mxu0 %v84
    %130 = vmatpush1.msra.mxu0 %v83
    %131 = vmatprep.subr.mxu0 %v86
    %132 = vmatpush1.msra.mxu0 %v85
    %133 = vmatprep.subr.mxu0 %v88
    %134 = vmatpush1.msra.mxu0 %v87
    %135 = vmatprep.subr.mxu0 %v90
    %136 = vmatpush1.msra.mxu0 %v89
    %137 = vmatprep.subr.mxu0 %v92
    %138 = vmatpush1.msra.mxu0 %v91
    %139 = vmatprep.subr.mxu0 %v94
    %140 = vmatpush1.msra.mxu0 %v93
    %141 = vmatprep.subr.mxu0 %v96
    %142 = vmatpush1.msra.mxu0 %v95
    %143 = vmatprep.subr.mxu0 %v98
    %144 = vmatpush1.msra.mxu0 %v97
    %145 = vmatprep.subr.mxu0 %v100
    %146 = vmatpush1.msra.mxu0 %v99
    %147 = vmatprep.subr.mxu0 %v102
    %148 = vmatpush1.msra.mxu0 %v101
    %149 = vmatprep.subr.mxu0 %v104
    %150 = vmatpush1.msra.mxu0 %v103
    %151 = vmatprep.subr.mxu0 %v106
    %152 = vmatpush1.msra.mxu0 %v105
    %153 = vmatprep.subr.mxu0 %v108
    %154 = vmatpush1.msra.mxu0 %v107
    %155 = vmatprep.subr.mxu0 %v110
    %156 = vmatpush1.msra.mxu0 %v109
    %157 = vmatprep.subr.mxu0 %v112
    %158 = vmatpush1.msra.mxu0 %v111
    %159 = vmatprep.subr.mxu0 %v114
    %160 = vmatpush1.msra.mxu0 %v113
    %161 = vmatprep.subr.mxu0 %v116
    %162 = vmatpush1.msra.mxu0 %v115
    %163 = vmatprep.subr.mxu0 %v118
    %164 = vmatpush1.msra.mxu0 %v117
    %165 = vmatprep.subr.mxu0 0.0
    %166 = vmatpush1.msra.mxu0 0.0
    %167 = vmatprep.subr.mxu0 0.0
    %168 = vmatpush1.msra.mxu0 0.0
    %169 = vmatprep.subr.mxu0 0.0
    %170 = vmatpush1.msra.mxu0 0.0
    %171 = vmatprep.subr.mxu0 0.0
    %172 = vmatpush1.msra.mxu0 0.0
    %173 = vmatprep.subr.mxu0 0.0
    %174 = vmatpush1.msra.mxu0 0.0
    %175 = vmatprep.subr.mxu0 0.0
    %176 = vmatpush1.msra.mxu0 0.0
    %177 = vmatprep.subr.mxu0 0.0
    %178 = vmatpush1.msra.mxu0 0.0
    %179 = vmatprep.subr.mxu0 0.0
    %180 = vmatpush1.msra.mxu0 0.0
    %181 = vmatprep.subr.mxu0 0.0
    %182 = vmatpush1.msra.mxu0 0.0
    %183 = vmatprep.subr.mxu0 0.0
    %184 = vmatpush1.msra.mxu0 0.0
    %185 = vmatprep.subr.mxu0 0.0
    %186 = vmatpush1.msra.mxu0 0.0
    %187 = vmatprep.mubr.f32.mxu0 %v121
    %188 = vmatmul.mubr.f32.gmra.mrb[0].mxu0 %v75
    %v189 = vpop.f32.mrb[0].mxu0
    %v190 = vadd.f32 0.0, %v189
    %v191 = vpop.f32.mrb[0].mxu0
    %v192 = vadd.f32 0.0, %v191
    %193 = vdwg.mxu0
    %195 = vrot.lane.b32.xlu0 %v190, 64
    %v196 = vpop.permute.xlu0 %195
    %vm197 = vcmask 130048
    %v198 = vsel %vm197, %v196, 0
    %v200 = vsel %vm197, %v190, 0
    %202 = vmatprep.subr.mxu0 0.0
    %203 = vmatpush1.xpose.msra.mxu0 %v200
    %204 = vmatprep.subr.mxu0 0.0
    %205 = vmatpush1.xpose.msra.mxu0 0.0
    %206 = vmatprep.subr.mxu0 0.0
    %207 = vmatpush1.xpose.msra.mxu0 0.0
    %208 = vmatprep.subr.mxu0 0.0
    %209 = vmatpush1.xpose.msra.mxu0 0.0
    %210 = vmatprep.subr.mxu0 0.0
    %211 = vmatpush1.xpose.msra.mxu0 0.0
    %212 = vmatprep.subr.mxu0 0.0
    %213 = vmatpush1.xpose.msra.mxu0 0.0
    %214 = vmatprep.subr.mxu0 0.0
    %215 = vmatpush1.xpose.msra.mxu0 0.0
    %216 = vmatprep.subr.mxu0 0.0
    %217 = vmatpush1.xpose.msra.mxu0 0.0
    %218 = vmatprep.subr.mxu0 0.0
    %219 = vmatpush1.xpose.msra.mxu0 0.0
    %220 = vmatprep.subr.mxu0 0.0
    %221 = vmatpush1.xpose.msra.mxu0 0.0
    %222 = vmatprep.subr.mxu0 0.0
    %223 = vmatpush1.xpose.msra.mxu0 0.0
    %224 = vmatprep.subr.mxu0 0.0
    %225 = vmatpush1.xpose.msra.mxu0 0.0
    %226 = vmatprep.subr.mxu0 0.0
    %227 = vmatpush1.xpose.msra.mxu0 0.0
    %228 = vmatprep.subr.mxu0 0.0
    %229 = vmatpush1.xpose.msra.mxu0 0.0
    %230 = vmatprep.subr.mxu0 0.0
    %231 = vmatpush1.xpose.msra.mxu0 0.0
    %232 = vmatprep.subr.mxu0 0.0
    %233 = vmatpush1.xpose.msra.mxu0 0.0
    %234 = vmatprep.subr.mxu0 0.0
    %235 = vmatpush1.xpose.msra.mxu0 0.0
    %236 = vmatprep.subr.mxu0 0.0
    %237 = vmatpush1.xpose.msra.mxu0 0.0
    %238 = vmatprep.subr.mxu0 0.0
    %239 = vmatpush1.xpose.msra.mxu0 0.0
    %240 = vmatprep.subr.mxu0 0.0
    %241 = vmatpush1.xpose.msra.mxu0 0.0
    %242 = vmatprep.subr.mxu0 0.0
    %243 = vmatpush1.xpose.msra.mxu0 0.0
    %244 = vmatprep.subr.mxu0 0.0
    %245 = vmatpush1.xpose.msra.mxu0 0.0
    %246 = vmatprep.subr.mxu0 0.0
    %247 = vmatpush1.xpose.msra.mxu0 0.0
    %248 = vmatprep.subr.mxu0 0.0
    %249 = vmatpush1.xpose.msra.mxu0 0.0
    %250 = vmatprep.subr.mxu0 0.0
    %251 = vmatpush1.xpose.msra.mxu0 0.0
    %252 = vmatprep.subr.mxu0 0.0
    %253 = vmatpush1.xpose.msra.mxu0 0.0
    %254 = vmatprep.subr.mxu0 0.0
    %255 = vmatpush1.xpose.msra.mxu0 0.0
    %256 = vmatprep.subr.mxu0 0.0
    %257 = vmatpush1.xpose.msra.mxu0 0.0
    %258 = vmatprep.subr.mxu0 0.0
    %259 = vmatpush1.xpose.msra.mxu0 0.0
    %260 = vmatprep.subr.mxu0 0.0
    %261 = vmatpush1.xpose.msra.mxu0 0.0
    %262 = vmatprep.subr.mxu0 0.0
    %263 = vmatpush1.xpose.msra.mxu0 0.0
    %264 = vmatprep.subr.mxu0 0.0
    %265 = vmatpush1.xpose.msra.mxu0 0.0
    %266 = vmatprep.mubr.f32.mxu0 0.0
    %267 = vmatmul.mubr.f32.gmra.mrb[0].mxu0 %v198
    %v268 = vpop.f32.mrb[0].mxu0
    %v269 = vadd.f32 0.0, %v268
    %v270 = vpop.f32.mrb[0].mxu0
    %271 = vdwg.mxu0
    %vm272 = vcmask 64512
    %v273 = vsel %vm272, %v269, -inf
    %v274 = vrot.slane %v273, 4
    %v275 = vmax.f32 %v273, %v274
    %v276 = vrot.slane %v275, 2
    %v277 = vmax.f32 %v275, %v276
    %v278 = vrot.slane %v277, 1
    %v279 = vmax.f32 %v277, %v278
    %v280 = vsub.f32 %v269, %v279
    %v281 = vmul.f32 %v280, 1.442695
    %v282 = vpow.pop %v281
    %v283 = vsel %vm272, %v282, 0.0
    %v284 = vrot.slane %v283, 4
    %v285 = vadd.f32 %v283, %v284
    %v286 = vrot.slane %v285, 2
    %v287 = vadd.f32 %v285, %v286
    %v288 = vrot.slane %v287, 1
    %v289 = vadd.f32 %v287, %v288
    %v290 = vrcp.pop %v289
    %292 = vset.pattern.permute.xlu0 0
    %293 = vperm.xlu0 %292, %v192
    %v294 = vpop.permute.xlu0 %293
    %v296 = vmul.f32 %v282, %v294
    %v297 = vsel %vm272, %v296, 0.0
    %v298 = vrot.slane %v297, 4
    %v299 = vadd.f32 %v297, %v298
    %v300 = vrot.slane %v299, 2
    %v301 = vadd.f32 %v299, %v300
    %v302 = vrot.slane %v301, 1
    %v303 = vadd.f32 %v301, %v302
    %v304 = vmul.f32 %v303, %v290
    %v305 = vadd.f32 %v304, 0.0
    %306 = vrot.lane.b32.xlu0 %v190, 48
    %v307 = vpop.permute.xlu0 %306
    %308 = vrot.lane.b32.xlu0 %v190, 112
    %v309 = vpop.permute.xlu0 %308
    %v310 = vsel %vm197, %v307, 0
    %v312 = vsel %vm197, %v309, 0
    %314 = vmatprep.subr.mxu0 0.0
    %315 = vmatpush1.xpose.msra.mxu0 %v312
    %316 = vmatprep.subr.mxu0 0.0
    %317 = vmatpush1.xpose.msra.mxu0 0.0
    %318 = vmatprep.subr.mxu0 0.0
    %319 = vmatpush1.xpose.msra.mxu0 0.0
    %320 = vmatprep.subr.mxu0 0.0
    %321 = vmatpush1.xpose.msra.mxu0 0.0
    %322 = vmatprep.subr.mxu0 0.0
    %323 = vmatpush1.xpose.msra.mxu0 0.0
    %324 = vmatprep.subr.mxu0 0.0
    %325 = vmatpush1.xpose.msra.mxu0 0.0
    %326 = vmatprep.subr.mxu0 0.0
    %327 = vmatpush1.xpose.msra.mxu0 0.0
    %328 = vmatprep.subr.mxu0 0.0
    %329 = vmatpush1.xpose.msra.mxu0 0.0
    %330 = vmatprep.subr.mxu0 0.0
    %331 = vmatpush1.xpose.msra.mxu0 0.0
    %332 = vmatprep.subr.mxu0 0.0
    %333 = vmatpush1.xpose.msra.mxu0 0.0
    %334 = vmatprep.subr.mxu0 0.0
    %335 = vmatpush1.xpose.msra.mxu0 0.0
    %336 = vmatprep.subr.mxu0 0.0
    %337 = vmatpush1.xpose.msra.mxu0 0.0
    %338 = vmatprep.subr.mxu0 0.0
    %339 = vmatpush1.xpose.msra.mxu0 0.0
    %340 = vmatprep.subr.mxu0 0.0
    %341 = vmatpush1.xpose.msra.mxu0 0.0
    %342 = vmatprep.subr.mxu0 0.0
    %343 = vmatpush1.xpose.msra.mxu0 0.0
    %344 = vmatprep.subr.mxu0 0.0
    %345 = vmatpush1.xpose.msra.mxu0 0.0
    %346 = vmatprep.subr.mxu0 0.0
    %347 = vmatpush1.xpose.msra.mxu0 0.0
    %348 = vmatprep.subr.mxu0 0.0
    %349 = vmatpush1.xpose.msra.mxu0 0.0
    %350 = vmatprep.subr.mxu0 0.0
    %351 = vmatpush1.xpose.msra.mxu0 0.0
    %352 = vmatprep.subr.mxu0 0.0
    %353 = vmatpush1.xpose.msra.mxu0 0.0
    %354 = vmatprep.subr.mxu0 0.0
    %355 = vmatpush1.xpose.msra.mxu0 0.0
    %356 = vmatprep.subr.mxu0 0.0
    %357 = vmatpush1.xpose.msra.mxu0 0.0
    %358 = vmatprep.subr.mxu0 0.0
    %359 = vmatpush1.xpose.msra.mxu0 0.0
    %360 = vmatprep.subr.mxu0 0.0
    %361 = vmatpush1.xpose.msra.mxu0 0.0
    %362 = vmatprep.subr.mxu0 0.0
    %363 = vmatpush1.xpose.msra.mxu0 0.0
    %364 = vmatprep.subr.mxu0 0.0
    %365 = vmatpush1.xpose.msra.mxu0 0.0
    %366 = vmatprep.subr.mxu0 0.0
    %367 = vmatpush1.xpose.msra.mxu0 0.0
    %368 = vmatprep.subr.mxu0 0.0
    %369 = vmatpush1.xpose.msra.mxu0 0.0
    %370 = vmatprep.subr.mxu0 0.0
    %371 = vmatpush1.xpose.msra.mxu0 0.0
    %372 = vmatprep.subr.mxu0 0.0
    %373 = vmatpush1.xpose.msra.mxu0 0.0
    %374 = vmatprep.subr.mxu0 0.0
    %375 = vmatpush1.xpose.msra.mxu0 0.0
    %376 = vmatprep.subr.mxu0 0.0
    %377 = vmatpush1.xpose.msra.mxu0 0.0
    %378 = vmatprep.mubr.f32.mxu0 0.0
    %379 = vmatmul.mubr.f32.gmra.mrb[0].mxu0 %v310
    %v380 = vpop.f32.mrb[0].mxu0
    %v381 = vadd.f32 0.0, %v380
    %v382 = vpop.f32.mrb[0].mxu0
    %383 = vdwg.mxu0
    %v384 = vsel %vm272, %v381, -inf
    %v385 = vrot.slane %v384, 4
    %v386 = vmax.f32 %v384, %v385
    %v387 = vrot.slane %v386, 2
    %v388 = vmax.f32 %v386, %v387
    %v389 = vrot.slane %v388, 1
    %v390 = vmax.f32 %v388, %v389
    %v391 = vsub.f32 %v381, %v390
    %v392 = vmul.f32 %v391, 1.442695
    %v393 = vpow.pop %v392
    %v394 = vsel %vm272, %v393, 0.0
    %v395 = vrot.slane %v394, 4
    %v396 = vadd.f32 %v394, %v395
    %v397 = vrot.slane %v396, 2
    %v398 = vadd.f32 %v396, %v397
    %v399 = vrot.slane %v398, 1
    %v400 = vadd.f32 %v398, %v399
    %v401 = vrcp.pop %v400
    %402 = vset.pattern.permute.xlu0 1
    %403 = vperm.xlu0 %402, %v192
    %v404 = vpop.permute.xlu0 %403
    %v406 = vmul.f32 %v393, %v404
    %v407 = vsel %vm272, %v406, 0.0
    %v408 = vrot.slane %v407, 4
    %v409 = vadd.f32 %v407, %v408
    %v410 = vrot.slane %v409, 2
    %v411 = vadd.f32 %v409, %v410
    %v412 = vrot.slane %v411, 1
    %v413 = vadd.f32 %v411, %v412
    %v414 = vmul.f32 %v413, %v401
    %v415 = vadd.f32 %v305, %v414
    %416 = vrot.lane.b32.xlu0 %v190, 32
    %v417 = vpop.permute.xlu0 %416
    %418 = vrot.lane.b32.xlu0 %v190, 96
    %v419 = vpop.permute.xlu0 %418
    %v420 = vsel %vm197, %v417, 0
    %v422 = vsel %vm197, %v419, 0
    %424 = vmatprep.subr.mxu0 0.0
    %425 = vmatpush1.xpose.msra.mxu0 %v422
    %426 = vmatprep.subr.mxu0 0.0
    %427 = vmatpush1.xpose.msra.mxu0 0.0
    %428 = vmatprep.subr.mxu0 0.0
    %429 = vmatpush1.xpose.msra.mxu0 0.0
    %430 = vmatprep.subr.mxu0 0.0
    %431 = vmatpush1.xpose.msra.mxu0 0.0
    %432 = vmatprep.subr.mxu0 0.0
    %433 = vmatpush1.xpose.msra.mxu0 0.0
    %434 = vmatprep.subr.mxu0 0.0
    %435 = vmatpush1.xpose.msra.mxu0 0.0
    %436 = vmatprep.subr.mxu0 0.0
    %437 = vmatpush1.xpose.msra.mxu0 0.0
    %438 = vmatprep.subr.mxu0 0.0
    %439 = vmatpush1.xpose.msra.mxu0 0.0
    %440 = vmatprep.subr.mxu0 0.0
    %441 = vmatpush1.xpose.msra.mxu0 0.0
    %442 = vmatprep.subr.mxu0 0.0
    %443 = vmatpush1.xpose.msra.mxu0 0.0
    %444 = vmatprep.subr.mxu0 0.0
    %445 = vmatpush1.xpose.msra.mxu0 0.0
    %446 = vmatprep.subr.mxu0 0.0
    %447 = vmatpush1.xpose.msra.mxu0 0.0
    %448 = vmatprep.subr.mxu0 0.0
    %449 = vmatpush1.xpose.msra.mxu0 0.0
    %450 = vmatprep.subr.mxu0 0.0
    %451 = vmatpush1.xpose.msra.mxu0 0.0
    %452 = vmatprep.subr.mxu0 0.0
    %453 = vmatpush1.xpose.msra.mxu0 0.0
    %454 = vmatprep.subr.mxu0 0.0
    %455 = vmatpush1.xpose.msra.mxu0 0.0
    %456 = vmatprep.subr.mxu0 0.0
    %457 = vmatpush1.xpose.msra.mxu0 0.0
    %458 = vmatprep.subr.mxu0 0.0
    %459 = vmatpush1.xpose.msra.mxu0 0.0
    %460 = vmatprep.subr.mxu0 0.0
    %461 = vmatpush1.xpose.msra.mxu0 0.0
    %462 = vmatprep.subr.mxu0 0.0
    %463 = vmatpush1.xpose.msra.mxu0 0.0
    %464 = vmatprep.subr.mxu0 0.0
    %465 = vmatpush1.xpose.msra.mxu0 0.0
    %466 = vmatprep.subr.mxu0 0.0
    %467 = vmatpush1.xpose.msra.mxu0 0.0
    %468 = vmatprep.subr.mxu0 0.0
    %469 = vmatpush1.xpose.msra.mxu0 0.0
    %470 = vmatprep.subr.mxu0 0.0
    %471 = vmatpush1.xpose.msra.mxu0 0.0
    %472 = vmatprep.subr.mxu0 0.0
    %473 = vmatpush1.xpose.msra.mxu0 0.0
    %474 = vmatprep.subr.mxu0 0.0
    %475 = vmatpush1.xpose.msra.mxu0 0.0
    %476 = vmatprep.subr.mxu0 0.0
    %477 = vmatpush1.xpose.msra.mxu0 0.0
    %478 = vmatprep.subr.mxu0 0.0
    %479 = vmatpush1.xpose.msra.mxu0 0.0
    %480 = vmatprep.subr.mxu0 0.0
    %481 = vmatpush1.xpose.msra.mxu0 0.0
    %482 = vmatprep.subr.mxu0 0.0
    %483 = vmatpush1.xpose.msra.mxu0 0.0
    %484 = vmatprep.subr.mxu0 0.0
    %485 = vmatpush1.xpose.msra.mxu0 0.0
    %486 = vmatprep.subr.mxu0 0.0
    %487 = vmatpush1.xpose.msra.mxu0 0.0
    %488 = vmatprep.mubr.f32.mxu0 0.0
    %489 = vmatmul.mubr.f32.gmra.mrb[0].mxu0 %v420
    %v490 = vpop.f32.mrb[0].mxu0
    %v491 = vadd.f32 0.0, %v490
    %v492 = vpop.f32.mrb[0].mxu0
    %493 = vdwg.mxu0
    %v494 = vsel %vm272, %v491, -inf
    %v495 = vrot.slane %v494, 4
    %v496 = vmax.f32 %v494, %v495
    %v497 = vrot.slane %v496, 2
    %v498 = vmax.f32 %v496, %v497
    %v499 = vrot.slane %v498, 1
    %v500 = vmax.f32 %v498, %v499
    %v501 = vsub.f32 %v491, %v500
    %v502 = vmul.f32 %v501, 1.442695
    %v503 = vpow.pop %v502
    %v504 = vsel %vm272, %v503, 0.0
    %v505 = vrot.slane %v504, 4
    %v506 = vadd.f32 %v504, %v505
    %v507 = vrot.slane %v506, 2
    %v508 = vadd.f32 %v506, %v507
    %v509 = vrot.slane %v508, 1
    %v510 = vadd.f32 %v508, %v509
    %v511 = vrcp.pop %v510
    %512 = vset.pattern.permute.xlu0 2
    %513 = vperm.xlu0 %512, %v192
    %v514 = vpop.permute.xlu0 %513
    %v516 = vmul.f32 %v503, %v514
    %v517 = vsel %vm272, %v516, 0.0
    %v518 = vrot.slane %v517, 4
    %v519 = vadd.f32 %v517, %v518
    %v520 = vrot.slane %v519, 2
    %v521 = vadd.f32 %v519, %v520
    %v522 = vrot.slane %v521, 1
    %v523 = vadd.f32 %v521, %v522
    %v524 = vmul.f32 %v523, %v511
    %v525 = vadd.f32 %v415, %v524
    %526 = vrot.lane.b32.xlu0 %v190, 16
    %v527 = vpop.permute.xlu0 %526
    %528 = vrot.lane.b32.xlu0 %v190, 80
    %v529 = vpop.permute.xlu0 %528
    %v530 = vsel %vm197, %v527, 0
    %v532 = vsel %vm197, %v529, 0
    %534 = vmatprep.subr.mxu0 0.0
    %535 = vmatpush1.xpose.msra.mxu0 %v532
    %536 = vmatprep.subr.mxu0 0.0
    %537 = vmatpush1.xpose.msra.mxu0 0.0
    %538 = vmatprep.subr.mxu0 0.0
    %539 = vmatpush1.xpose.msra.mxu0 0.0
    %540 = vmatprep.subr.mxu0 0.0
    %541 = vmatpush1.xpose.msra.mxu0 0.0
    %542 = vmatprep.subr.mxu0 0.0
    %543 = vmatpush1.xpose.msra.mxu0 0.0
    %544 = vmatprep.subr.mxu0 0.0
    %545 = vmatpush1.xpose.msra.mxu0 0.0
    %546 = vmatprep.subr.mxu0 0.0
    %547 = vmatpush1.xpose.msra.mxu0 0.0
    %548 = vmatprep.subr.mxu0 0.0
    %549 = vmatpush1.xpose.msra.mxu0 0.0
    %550 = vmatprep.subr.mxu0 0.0
    %551 = vmatpush1.xpose.msra.mxu0 0.0
    %552 = vmatprep.subr.mxu0 0.0
    %553 = vmatpush1.xpose.msra.mxu0 0.0
    %554 = vmatprep.subr.mxu0 0.0
    %555 = vmatpush1.xpose.msra.mxu0 0.0
    %556 = vmatprep.subr.mxu0 0.0
    %557 = vmatpush1.xpose.msra.mxu0 0.0
    %558 = vmatprep.subr.mxu0 0.0
    %559 = vmatpush1.xpose.msra.mxu0 0.0
    %560 = vmatprep.subr.mxu0 0.0
    %561 = vmatpush1.xpose.msra.mxu0 0.0
    %562 = vmatprep.subr.mxu0 0.0
    %563 = vmatpush1.xpose.msra.mxu0 0.0
    %564 = vmatprep.subr.mxu0 0.0
    %565 = vmatpush1.xpose.msra.mxu0 0.0
    %566 = vmatprep.subr.mxu0 0.0
    %567 = vmatpush1.xpose.msra.mxu0 0.0
    %568 = vmatprep.subr.mxu0 0.0
    %569 = vmatpush1.xpose.msra.mxu0 0.0
    %570 = vmatprep.subr.mxu0 0.0
    %571 = vmatpush1.xpose.msra.mxu0 0.0
    %572 = vmatprep.subr.mxu0 0.0
    %573 = vmatpush1.xpose.msra.mxu0 0.0
    %574 = vmatprep.subr.mxu0 0.0
    %575 = vmatpush1.xpose.msra.mxu0 0.0
    %576 = vmatprep.subr.mxu0 0.0
    %577 = vmatpush1.xpose.msra.mxu0 0.0
    %578 = vmatprep.subr.mxu0 0.0
    %579 = vmatpush1.xpose.msra.mxu0 0.0
    %580 = vmatprep.subr.mxu0 0.0
    %581 = vmatpush1.xpose.msra.mxu0 0.0
    %582 = vmatprep.subr.mxu0 0.0
    %583 = vmatpush1.xpose.msra.mxu0 0.0
    %584 = vmatprep.subr.mxu0 0.0
    %585 = vmatpush1.xpose.msra.mxu0 0.0
    %586 = vmatprep.subr.mxu0 0.0
    %587 = vmatpush1.xpose.msra.mxu0 0.0
    %588 = vmatprep.subr.mxu0 0.0
    %589 = vmatpush1.xpose.msra.mxu0 0.0
    %590 = vmatprep.subr.mxu0 0.0
    %591 = vmatpush1.xpose.msra.mxu0 0.0
    %592 = vmatprep.subr.mxu0 0.0
    %593 = vmatpush1.xpose.msra.mxu0 0.0
    %594 = vmatprep.subr.mxu0 0.0
    %595 = vmatpush1.xpose.msra.mxu0 0.0
    %596 = vmatprep.subr.mxu0 0.0
    %597 = vmatpush1.xpose.msra.mxu0 0.0
    %598 = vmatprep.mubr.f32.mxu0 0.0
    %599 = vmatmul.mubr.f32.gmra.mrb[0].mxu0 %v530
    %v600 = vpop.f32.mrb[0].mxu0
    %v601 = vadd.f32 0.0, %v600
    %v602 = vpop.f32.mrb[0].mxu0
    %603 = vdwg.mxu0
    %v604 = vsel %vm272, %v601, -inf
    %v605 = vrot.slane %v604, 4
    %v606 = vmax.f32 %v604, %v605
    %v607 = vrot.slane %v606, 2
    %v608 = vmax.f32 %v606, %v607
    %v609 = vrot.slane %v608, 1
    %v610 = vmax.f32 %v608, %v609
    %v611 = vsub.f32 %v601, %v610
    %v612 = vmul.f32 %v611, 1.442695
    %v613 = vpow.pop %v612
    %v614 = vsel %vm272, %v613, 0.0
    %v615 = vrot.slane %v614, 4
    %v616 = vadd.f32 %v614, %v615
    %v617 = vrot.slane %v616, 2
    %v618 = vadd.f32 %v616, %v617
    %v619 = vrot.slane %v618, 1
    %v620 = vadd.f32 %v618, %v619
    %v621 = vrcp.pop %v620
    %622 = vset.pattern.permute.xlu0 3
    %623 = vperm.xlu0 %622, %v192
    %v624 = vpop.permute.xlu0 %623
    %v626 = vmul.f32 %v613, %v624
    %v627 = vsel %vm272, %v626, 0.0
    %v628 = vrot.slane %v627, 4
    %v629 = vadd.f32 %v627, %v628
    %v630 = vrot.slane %v629, 2
    %v631 = vadd.f32 %v629, %v630
    %v632 = vrot.slane %v631, 1
    %v633 = vadd.f32 %v631, %v632
    %v634 = vmul.f32 %v633, %v621
    %v635 = vadd.f32 %v525, %v634
    %v636 = vxor.u32 %v635, 2147483648
    %v637 = vmul.f32 %v636, 1.442695
    %v638 = vpow.pop %v637
    %v639 = vadd.f32 %v638, 1.0
    %v640 = vrcp.pop %v639
    %v641 = vmul.f32 1.0, %v640
    %v642 = vmul.f32 %v641, 5.0
    %vm643 = vcmask 57344
    %644 = vst.msk [vmem:[#allocation5] sm:$0x1] %vm643, %v642
    // Predicated region
    $region14: #{forward.1} parent=1 // pred_check
      _
    $region15: #{forward.1} parent=1 // pred_check_branch
      %646 = sbr.rel (0) target = $region17
    $region16: #{forward.1} parent=1 // pred_region
      %s648 = ssub.s32 16, 16
      %649 = vsyncadd [#allocation4], %s648
      %s651 = sshll.u32 [#allocation5], 4
      %s652 = int_to_ptr.vmem [resolvable:$true] %s651
      %654 = dma.vmem_to_hbm [thread:$0]  %s652, 16, %s2, [#allocation4]
    $region17: #{forward.1} parent=1 // pred_fallthru
      _
    // Predicated region
    $region18: #{forward.1} parent=1 // pred_check
      _
    $region19: #{forward.1} parent=1 // pred_check_branch
      %656 = sbr.rel (0) target = $region21
    $region20: #{forward.1} parent=1 // pred_region
      %657 = dma.done [#allocation4], 16
    $region21: #{forward.1} parent=1 // pred_fallthru
      _
    %658 = vsyncpa [#allocation3], 1
    %659 = vsyncpa [#allocation4], 1

</llo_original>
